<compile_context>
chip_gen: v7x
topology: tpu7x:2x2x1
jax: 0.10.0
libtpu: 0.0.40
codegen_flags: <defaults>
</compile_context>

<pallas_src>
import math

import jax
import jax.numpy as jnp
from jax.experimental import pallas as pl
from jax.experimental.pallas import tpu as pltpu

WIND_SHAPE = (1, 11, 13, 13, 3, 1)
N_WIND = 1 * 11 * 13 * 13 * 3 * 1           # 5577
LANES = 128
SUBLANES = 8
ROWS = -(-N_WIND // (LANES * SUBLANES)) * SUBLANES   # 48  (full (8,128) tiles)
N_PAD = ROWS * LANES                          # 6144
TWO_PI = 2.0 * math.pi


def _wind_kernel(scalars_ref, wind_ref, wind_out_ref):
    """scalars_ref : SMEM (2,)               = [scale, bias]  (scale = 1/std, bias = -mean/std)
       wind_ref    : VMEM (2, ROWS, LANES)   = [speed, direction] (flattened + padded)
       wind_out_ref: VMEM (3, ROWS, LANES)   channel-major [scaled_speed, cos, sin]
    """
    scale = scalars_ref[0]
    bias = scalars_ref[1]
    d = wind_ref[1]
    wind_out_ref[0] = wind_ref[0] * scale + bias    # == (speed - mean) / std
    wind_out_ref[1] = jnp.cos(d)
    wind_out_ref[2] = jnp.sin(d)


def wind_input_forward(x, wind_speed_tensor, wind_dir_tensor,
                       wind_speed_mean, wind_speed_std,
                       time_of_day, time_of_year,
                       *, channel_major: bool = False):
    """Mirrors OptimizableWindInput.forward(x); `x` is ignored (as in PyTorch).

    Returns (wind_with_dir, time_features).
      channel_major=False (default): wind_with_dir is (1,11,13,13,3,3) — the
        module's output contract (one small XLA transpose in the wrapper).
      channel_major=True: wind_with_dir is the lane-dense (3, N_WIND) slab the
        kernel produces (rows = [scaled_speed, cos(dir), sin(dir)]); use this
        when the consumer can take channel-major data and skip the transpose.
    """
    del x  # the PyTorch forward never uses x

    # TODO(synk): ndarray-valued wind_speed_mean/std (per-element transform_numpy)
    # path not implemented; only the scalar (float) constructor path is supported.
    mean = jnp.asarray(wind_speed_mean, jnp.float32).reshape(())
    std = jnp.asarray(wind_speed_std, jnp.float32).reshape(())
    scale = 1.0 / std
    bias = -mean * scale
    scalars = jnp.stack([scale, bias])

    # One stacked, lane-dense VMEM input slab built with a single pad:
    # (2, N_WIND) -> (2, N_PAD) -> (2, ROWS, LANES).
    stacked = jnp.stack([jnp.ravel(wind_speed_tensor).astype(jnp.float32),
                         jnp.ravel(wind_dir_tensor).astype(jnp.float32)])
    wind_packed = jnp.pad(stacked, ((0, 0), (0, N_PAD - N_WIND))).reshape(
        2, ROWS, LANES)

    cost = pl.CostEstimate(flops=2 * N_WIND,
                           transcendentals=2 * N_WIND,
                           bytes_accessed=(2 + 3) * N_PAD * 4)

    wind_out = pl.pallas_call(
        _wind_kernel,
        out_shape=jax.ShapeDtypeStruct((3, ROWS, LANES), jnp.float32),
        in_specs=[pl.BlockSpec(memory_space=pltpu.MemorySpace.SMEM),
                  pl.BlockSpec(memory_space=pltpu.MemorySpace.VMEM)],
        out_specs=pl.BlockSpec(memory_space=pltpu.MemorySpace.VMEM),
        cost_estimate=cost,
    )(scalars, wind_packed)

    # Time features in plain jnp: 5 scalar ops that fuse with surrounding XLA;
    # keeping them out of the kernel removes an output DMA and 4 scalar
    # EUP round-trips from the kernel epilogue.
    tod = jnp.asarray(time_of_day, jnp.float32).reshape(())
    toy = jnp.asarray(time_of_year, jnp.float32).reshape(())
    time_features = jnp.stack([jnp.mod(tod / TWO_PI, 1.0),
                               jnp.cos(tod), jnp.sin(tod),
                               jnp.cos(toy), jnp.sin(toy)]).reshape(1, 5)

    # Drop the padded tail (it holds scale*0+bias / cos(0) / sin(0), not zeros).
    wind_flat = wind_out.reshape(3, N_PAD)[:, :N_WIND]            # (3, N_WIND)
    if channel_major:
        return wind_flat, time_features

    # Glue only to honour the module's (1,11,13,13,3,3) contract (lane-width-3
    # transpose; this is the most expensive op in the pipeline — prefer
    # channel_major=True when the consumer allows it).
    wind_with_dir = jnp.transpose(wind_flat, (1, 0)).reshape(
        WIND_SHAPE[:-1] + (3,))
    return wind_with_dir, time_features


def _init_params(key):
    """Deterministic parameter init matching the module's __init__ shapes."""
    k_dir, k_s0, k_s1, k_s2, k_tod, k_toy = jax.random.split(key, 6)

    wind_dir = jax.random.uniform(k_dir, WIND_SHAPE, jnp.float32,
                                  minval=0.0, maxval=TWO_PI)

    def trunc(k, mean, std):
        lo = (0.0 - mean) / std
        hi = (45.0 - mean) / std
        z = jax.random.truncated_normal(k, lo, hi, (1, 11, 13, 13, 1),
                                        jnp.float32)
        return mean + std * z

    wind_speed = jnp.stack(
        [trunc(k_s0, 4.2, 4.2), trunc(k_s1, 7.1, 5.0), trunc(k_s2, 7.7, 5.3)],
        axis=4)                                                  # (1,11,13,13,3,1)

    time_of_day = jax.random.uniform(k_tod, (1,), jnp.float32, 0.0, TWO_PI)
    time_of_year = jax.random.uniform(k_toy, (1,), jnp.float32, 0.0, TWO_PI)
    return wind_speed, wind_dir, time_of_day, time_of_year


if __name__ == "__main__":
    key = jax.random.PRNGKey(0)
    k_params, k_x = jax.random.split(key)
    wind_speed, wind_dir, tod, toy = _init_params(k_params)

    # scalar (float) path of transform_numpy
    wind_mean = 6.0
    wind_std = 4.5

    # forward input `x` (unused by the module's forward, as in PyTorch)
    x = jax.random.normal(k_x, (2, 4, 16, 16), jnp.float32)

    fwd_module = jax.jit(wind_input_forward)
    fwd_lane = jax.jit(lambda *a: wind_input_forward(*a, channel_major=True))

    wind_with_dir, time_features = fwd_module(
        x, wind_speed, wind_dir, wind_mean, wind_std, tod, toy)
    wind_cm, time_features_cm = fwd_lane(
        x, wind_speed, wind_dir, wind_mean, wind_std, tod, toy)
    jax.block_until_ready((wind_with_dir, time_features, wind_cm, time_features_cm))

    # pure-JAX reference check
    ref_wind = jnp.concatenate(
        [(wind_speed - wind_mean) / wind_std, jnp.cos(wind_dir),
         jnp.sin(wind_dir)], axis=-1)
    ref_time = jnp.stack(
        [jnp.mod(tod[0] / TWO_PI, 1.0), jnp.cos(tod[0]), jnp.sin(tod[0]),
         jnp.cos(toy[0]), jnp.sin(toy[0])]).reshape(1, 5)
    ref_cm = jnp.transpose(ref_wind.reshape(N_WIND, 3), (1, 0))

    assert wind_with_dir.shape == (1, 11, 13, 13, 3, 3)
    assert time_features.shape == (1, 5)
    assert wind_cm.shape == (3, N_WIND)
    assert jnp.allclose(wind_with_dir, ref_wind, atol=1e-5)
    assert jnp.allclose(time_features, ref_time, atol=1e-5)
    assert jnp.allclose(wind_cm, ref_cm, atol=1e-5)
    assert jnp.allclose(time_features_cm, ref_time, atol=1e-5)

    print("KERNEL_OK")
</pallas_src>

<mosaic_0001>
module attributes {stable_mosaic.version = 11 : i64} {
  func.func @_wind_kernel(%arg0: memref<2xf32, #tpu.memory_space<smem>>, %arg1: memref<2x48x128xf32, #tpu.memory_space<vmem>>, %arg2: memref<3x48x128xf32, #tpu.memory_space<vmem>>) attributes {dimension_semantics = [], scalar_prefetch = 0 : i64, scratch_operands = 0 : i64, tpu.core_type = #tpu.core_type<tc>} {
    %c0 = arith.constant 0 : index
    %0 = memref.load %arg0[%c0] : memref<2xf32, #tpu.memory_space<smem>>
    %c1 = arith.constant 1 : index
    %1 = memref.load %arg0[%c1] : memref<2xf32, #tpu.memory_space<smem>>
    %c1_0 = arith.constant 1 : index
    %c0_1 = arith.constant 0 : index
    %c0_2 = arith.constant 0 : index
    %2 = vector.load %arg1[%c1_0, %c0_1, %c0_2] : memref<2x48x128xf32, #tpu.memory_space<vmem>>, vector<1x48x128xf32>
    %3 = vector.shape_cast %2 : vector<1x48x128xf32> to vector<48x128xf32>
    %c0_3 = arith.constant 0 : index
    %c0_4 = arith.constant 0 : index
    %c0_5 = arith.constant 0 : index
    %4 = vector.load %arg1[%c0_3, %c0_4, %c0_5] : memref<2x48x128xf32, #tpu.memory_space<vmem>>, vector<1x48x128xf32>
    %5 = vector.shape_cast %4 : vector<1x48x128xf32> to vector<48x128xf32>
    %6 = vector.broadcast %0 : f32 to vector<48x128xf32>
    %7 = arith.mulf %5, %6 : vector<48x128xf32>
    %8 = vector.broadcast %1 : f32 to vector<48x128xf32>
    %9 = arith.addf %7, %8 : vector<48x128xf32>
    %c0_6 = arith.constant 0 : index
    %c0_7 = arith.constant 0 : index
    %c0_8 = arith.constant 0 : index
    %10 = vector.load %arg2[%c0_6, %c0_7, %c0_8] : memref<3x48x128xf32, #tpu.memory_space<vmem>>, vector<1x48x128xf32>
    %11 = vector.shape_cast %10 : vector<1x48x128xf32> to vector<48x128xf32>
    %12 = vector.shape_cast %9 : vector<48x128xf32> to vector<1x48x128xf32>
    tpu.vector_store %arg2[%c0_6, %c0_7, %c0_8], %12 {strides = array<i32>} : memref<3x48x128xf32, #tpu.memory_space<vmem>>, vector<1x48x128xf32>,
    %13 = math.cos %3 : vector<48x128xf32>
    %c1_9 = arith.constant 1 : index
    %c0_10 = arith.constant 0 : index
    %c0_11 = arith.constant 0 : index
    %14 = vector.load %arg2[%c1_9, %c0_10, %c0_11] : memref<3x48x128xf32, #tpu.memory_space<vmem>>, vector<1x48x128xf32>
    %15 = vector.shape_cast %14 : vector<1x48x128xf32> to vector<48x128xf32>
    %16 = vector.shape_cast %13 : vector<48x128xf32> to vector<1x48x128xf32>
    tpu.vector_store %arg2[%c1_9, %c0_10, %c0_11], %16 {strides = array<i32>} : memref<3x48x128xf32, #tpu.memory_space<vmem>>, vector<1x48x128xf32>,
    %17 = math.sin %3 : vector<48x128xf32>
    %c2 = arith.constant 2 : index
    %c0_12 = arith.constant 0 : index
    %c0_13 = arith.constant 0 : index
    %18 = vector.load %arg2[%c2, %c0_12, %c0_13] : memref<3x48x128xf32, #tpu.memory_space<vmem>>, vector<1x48x128xf32>
    %19 = vector.shape_cast %18 : vector<1x48x128xf32> to vector<48x128xf32>
    %20 = vector.shape_cast %17 : vector<48x128xf32> to vector<1x48x128xf32>
    tpu.vector_store %arg2[%c2, %c0_12, %c0_13], %20 {strides = array<i32>} : memref<3x48x128xf32, #tpu.memory_space<vmem>>, vector<1x48x128xf32>,
    return
  }
}

</mosaic_0001>

<llo_original>
// kernel: wind_input_forward.1
$region0: #{wind_input_forward.1}
  #allocation0 [shape = 'u32[]', space=smem, size = 0x4, offset = 0x4, fixed_abs, tag = 'smem constant byte address 0x4 - core index']
  #allocation1 [shape = 'u32[144,128]{1,0:T(1,128)}', space=vmem, size = 0x12000, scoped, tag = 'internal scratch']
  %s0 = inlined_call_operand.vmem [shape: f32[2], index: 0, kind: input, shape index: {}]
  %s1 = inlined_call_operand.vmem [shape: f32[2,48,128], index: 1, kind: input, shape index: {}]
  %s2 = inlined_call_operand.vmem [shape: f32[3,48,128], index: 2, kind: output, shape index: {}]
  %s3 = sld [smem:[#allocation0]]
  $region22: #{wind_input_forward.1} parent=0
    _
  %s5 = ssub.s32 1, %s3
  %s6 = scalar_select 0, %s5, %s3
  $region1: #{wind_input_forward.1} parent=0
    #allocation2 [shape = 'u8[512]{0}', space=smem, size = 0x200, scoped, tag = 'input window, operand 0, single buffered']
    #allocation3 [shape = 's32[1]{0}', space=sflag, size = 0x4, scoped, tag = 'scoped memory for wind_input_forward.1']
    %7 = vsyncpa [#allocation3], 0
    // Predicated region
    $region2: #{wind_input_forward.1} parent=1 // pred_check
      _
    $region3: #{wind_input_forward.1} parent=1 // pred_check_branch
      %9 = sbr.rel (0) target = $region5
    $region4: #{wind_input_forward.1} parent=1 // pred_region
      %s11 = ssub.s32 16, 16
      %12 = vsyncadd [#allocation3], %s11
      %s14 = sshll.u32 %s0, 4
      %s15 = int_to_ptr.vmem [resolvable:$true] %s14
      %17 = dma.vmem_to_smem %s15, 16, [#allocation2], [#allocation3]
    $region5: #{wind_input_forward.1} parent=1 // pred_fallthru
      _
    // Predicated region
    $region6: #{wind_input_forward.1} parent=1 // pred_check
      _
    $region7: #{wind_input_forward.1} parent=1 // pred_check_branch
      %19 = sbr.rel (0) target = $region9
    $region8: #{wind_input_forward.1} parent=1 // pred_region
      _
    $region9: #{wind_input_forward.1} parent=1 // pred_fallthru
      _
    // Predicated region
    $region10: #{wind_input_forward.1} parent=1 // pred_check
      _
    $region11: #{wind_input_forward.1} parent=1 // pred_check_branch
      %21 = sbr.rel (0) target = $region13
    $region12: #{wind_input_forward.1} parent=1 // pred_region
      %22 = dma.done [#allocation3], 16
    $region13: #{wind_input_forward.1} parent=1 // pred_fallthru
      _
    %23 = sfence
    %s24 = sld [smem:[#allocation2]]
    %s25 = sld [smem:[#allocation2 + $0x1]]
    %s26 = scalar_lea.vmem %s1, 48
    %v27 = vld [vmem:[%s26] sm:$0xff]
    %v28 = vld [vmem:[%s26 + $0x8] sm:$0xff]
    %v29 = vld [vmem:[%s26 + $0x10] sm:$0xff]
    %v30 = vld [vmem:[%s26 + $0x18] sm:$0xff]
    %v31 = vld [vmem:[%s26 + $0x20] sm:$0xff]
    %v32 = vld [vmem:[%s26 + $0x28] sm:$0xff]
    %v33 = vld [vmem:[%s1] sm:$0xff]
    %v34 = vld [vmem:[%s1 + $0x8] sm:$0xff]
    %v35 = vld [vmem:[%s1 + $0x10] sm:$0xff]
    %v36 = vld [vmem:[%s1 + $0x18] sm:$0xff]
    %v37 = vld [vmem:[%s1 + $0x20] sm:$0xff]
    %v38 = vld [vmem:[%s1 + $0x28] sm:$0xff]
    %v39 = vstv %s24
    %v40 = vmul.f32 %v33, %v39
    %v41 = vmul.f32 %v34, %v39
    %v42 = vmul.f32 %v35, %v39
    %v43 = vmul.f32 %v36, %v39
    %v44 = vmul.f32 %v37, %v39
    %v45 = vmul.f32 %v38, %v39
    %v46 = vstv %s25
    %v47 = vadd.f32 %v40, %v46
    %v48 = vadd.f32 %v41, %v46
    %v49 = vadd.f32 %v42, %v46
    %v50 = vadd.f32 %v43, %v46
    %v51 = vadd.f32 %v44, %v46
    %v52 = vadd.f32 %v45, %v46
    %53 = vst [vmem:[%s2] sm:$0xff] %v47
    %54 = vst [vmem:[%s2 + $0x8] sm:$0xff] %v48
    %55 = vst [vmem:[%s2 + $0x10] sm:$0xff] %v49
    %56 = vst [vmem:[%s2 + $0x18] sm:$0xff] %v50
    %57 = vst [vmem:[%s2 + $0x20] sm:$0xff] %v51
    %58 = vst [vmem:[%s2 + $0x28] sm:$0xff] %v52
    %v59 = vand.u32 2147483647, %v27
    %vm60 = vcmp.le.f32.partialorder %v59, 0.7853982
    %vm61 = vcmp.lt.s32.totalorder %v27, 0
    %v62 = vand.u32 %v27, 2139095040
    %v63 = vshrl.u32 %v62, 23
    %v64 = vsub.s32 %v63, 127
    %v65 = vand.u32 2147483647, %v27
    %v66 = vand.u32 %v65, 8388607
    %v67 = vor.u32 %v66, 8388608
    %v68 = vsub.s32 0, %v67
    %v69 = vadd.s32 %v64, 1
    %vm70 = vcmp.gt.s32.totalorder %v69, 0
    %v71 = vsel %vm70, %v69, 0
    %v72 = vshrl.u32 %v71, 5
    %v73 = vand.u32 %v71, 31
    %v74 = vsub.s32 32, %v73
    %v75 = vshrl.u32 683565275, %v74
    %v76 = vshll.u32 683565275, %v73
    %v77 = vshrl.u32 2475754826, %v74
    %v78 = vor.u32 %v76, %v77
    %v79 = vshll.u32 2475754826, %v73
    %v80 = vshrl.u32 2131351028, %v74
    %v81 = vor.u32 %v79, %v80
    %v82 = vshll.u32 2131351028, %v73
    %v83 = vshrl.u32 2102212464, %v74
    %v84 = vor.u32 %v82, %v83
    %v85 = vshll.u32 2102212464, %v73
    %v86 = vshrl.u32 920167782, %v74
    %v87 = vor.u32 %v85, %v86
    %v88 = vshll.u32 920167782, %v73
    %v89 = vshrl.u32 1326507024, %v74
    %v90 = vor.u32 %v88, %v89
    %vm91 = vcmp.lt.s32.totalorder %v72, 1
    %vm92 = vcmp.lt.s32.totalorder %v72, 2
    %vm93 = vcmp.lt.s32.totalorder %v72, 3
    %vm94 = vcmp.lt.s32.totalorder %v72, 4
    %v95 = vsel %vm91, %v75, %v78
    %v96 = vsel %vm94, %v84, 2102212464
    %v97 = vsel %vm93, %v81, %v96
    %v98 = vsel %vm92, %v95, %v97
    %v99 = vsel %vm91, %v78, %v81
    %v100 = vsel %vm94, %v87, 920167782
    %v101 = vsel %vm93, %v84, %v100
    %v102 = vsel %vm92, %v99, %v101
    %v103 = vsel %vm91, %v81, %v84
    %v104 = vsel %vm94, %v90, 1326507024
    %v105 = vsel %vm93, %v87, %v104
    %v106 = vsel %vm92, %v103, %v105
    %v107 = vshll.u32 %v67, 8
    %v108 = vmul.u32.u64.compose %v107, %v106
    %v109 = vextract.low.u32 %v108
    %v110 = vextract.high.u32 %v108
    %v111 = vmul.u32.u64.compose %v107, %v102
    %v112 = vextract.low.u32 %v111
    %v113 = vextract.high.u32 %v111
    %v114 = vmul.u32 %v107, %v98
    %v115 = vadd.s32 %v110, %v112
    %vm116 = vc.u32 %v110, %v112
    %v117 = vadd.s32 %v113, 1
    %v118 = vsel %vm116, %v117, %v113
    %v119 = vadd.s32 %v114, %v118
    %v120 = vadd.s32 %v119, 536870912
    %v121 = vshrl.u32 %v120, 30
    %v122 = vshll.u32 %v121, 30
    %v123 = vsub.s32 %v119, %v122
    %vm124 = vcmp.lt.s32.totalorder %v123, 0
    %v125 = vsub.s32 0, %v123
    %v126 = vsel %vm124, %v125, %v123
    %v127 = vclz %v126
    %v128 = vsub.s32 %v127, 2
    %vm129 = vcmp.gt.s32.totalorder 0, %v128
    %v130 = vsel %vm129, 0, %v128
    %v131 = vsub.s32 32, %v130
    %v132 = vshll.u32 %v123, %v130
    %v133 = vshrl.u32 %v115, %v131
    %v134 = vor.u32 %v132, %v133
    %v135 = vsub.s32 4294967266, %v130
    %v136 = vadd.s32 %v135, 127
    %v137 = vshll.u32 %v136, 23
    %v138 = vor.u32 4788187, %v137
    %v139 = vand.u32 2147483647, %v138
    %v141 = vcvt.s32.f32 %v134
    %v142 = vmul.f32 %v141, %v139
    %v143 = vxor.u32 %v142, 2147483648
    %v144 = vsel %vm61, %v143, %v142
    %v145 = vsub.s32 4, %v121
    %v146 = vsel %vm61, %v145, %v121
    %v147 = vsel %vm60, %v27, %v144
    %v148 = vsel %vm60, 0, %v146
    %v149 = vcosq.f32.pop %v147
    %v150 = vsinq.f32.pop %v147
    %vm151 = vweird.f32 %v27
    %v152 = vand.u32 %v148, 3
    %vm153 = vcmp.lt.s32.totalorder %v152, 2
    %vm154 = vcmp.eq.s32.totalorder %v152, 0
    %v155 = vxor.u32 %v150, 2147483648
    %v156 = vsel %vm154, %v149, %v155
    %vm157 = vcmp.eq.s32.totalorder %v152, 2
    %v158 = vxor.u32 %v149, 2147483648
    %v159 = vsel %vm157, %v158, %v150
    %v160 = vsel %vm153, %v156, %v159
    %v161 = vsel %vm151, nan, %v160
    %v162 = vand.u32 2147483647, %v28
    %vm163 = vcmp.le.f32.partialorder %v162, 0.7853982
    %vm164 = vcmp.lt.s32.totalorder %v28, 0
    %v165 = vand.u32 %v28, 2139095040
    %v166 = vshrl.u32 %v165, 23
    %v167 = vsub.s32 %v166, 127
    %v168 = vand.u32 2147483647, %v28
    %v169 = vand.u32 %v168, 8388607
    %v170 = vor.u32 %v169, 8388608
    %v171 = vsub.s32 0, %v170
    %v172 = vadd.s32 %v167, 1
    %vm173 = vcmp.gt.s32.totalorder %v172, 0
    %v174 = vsel %vm173, %v172, 0
    %v175 = vshrl.u32 %v174, 5
    %v176 = vand.u32 %v174, 31
    %v177 = vsub.s32 32, %v176
    %v178 = vshrl.u32 683565275, %v177
    %v179 = vshll.u32 683565275, %v176
    %v180 = vshrl.u32 2475754826, %v177
    %v181 = vor.u32 %v179, %v180
    %v182 = vshll.u32 2475754826, %v176
    %v183 = vshrl.u32 2131351028, %v177
    %v184 = vor.u32 %v182, %v183
    %v185 = vshll.u32 2131351028, %v176
    %v186 = vshrl.u32 2102212464, %v177
    %v187 = vor.u32 %v185, %v186
    %v188 = vshll.u32 2102212464, %v176
    %v189 = vshrl.u32 920167782, %v177
    %v190 = vor.u32 %v188, %v189
    %v191 = vshll.u32 920167782, %v176
    %v192 = vshrl.u32 1326507024, %v177
    %v193 = vor.u32 %v191, %v192
    %vm194 = vcmp.lt.s32.totalorder %v175, 1
    %vm195 = vcmp.lt.s32.totalorder %v175, 2
    %vm196 = vcmp.lt.s32.totalorder %v175, 3
    %vm197 = vcmp.lt.s32.totalorder %v175, 4
    %v198 = vsel %vm194, %v178, %v181
    %v199 = vsel %vm197, %v187, 2102212464
    %v200 = vsel %vm196, %v184, %v199
    %v201 = vsel %vm195, %v198, %v200
    %v202 = vsel %vm194, %v181, %v184
    %v203 = vsel %vm197, %v190, 920167782
    %v204 = vsel %vm196, %v187, %v203
    %v205 = vsel %vm195, %v202, %v204
    %v206 = vsel %vm194, %v184, %v187
    %v207 = vsel %vm197, %v193, 1326507024
    %v208 = vsel %vm196, %v190, %v207
    %v209 = vsel %vm195, %v206, %v208
    %v210 = vshll.u32 %v170, 8
    %v211 = vmul.u32.u64.compose %v210, %v209
    %v212 = vextract.low.u32 %v211
    %v213 = vextract.high.u32 %v211
    %v214 = vmul.u32.u64.compose %v210, %v205
    %v215 = vextract.low.u32 %v214
    %v216 = vextract.high.u32 %v214
    %v217 = vmul.u32 %v210, %v201
    %v218 = vadd.s32 %v213, %v215
    %vm219 = vc.u32 %v213, %v215
    %v220 = vadd.s32 %v216, 1
    %v221 = vsel %vm219, %v220, %v216
    %v222 = vadd.s32 %v217, %v221
    %v223 = vadd.s32 %v222, 536870912
    %v224 = vshrl.u32 %v223, 30
    %v225 = vshll.u32 %v224, 30
    %v226 = vsub.s32 %v222, %v225
    %vm227 = vcmp.lt.s32.totalorder %v226, 0
    %v228 = vsub.s32 0, %v226
    %v229 = vsel %vm227, %v228, %v226
    %v230 = vclz %v229
    %v231 = vsub.s32 %v230, 2
    %vm232 = vcmp.gt.s32.totalorder 0, %v231
    %v233 = vsel %vm232, 0, %v231
    %v234 = vsub.s32 32, %v233
    %v235 = vshll.u32 %v226, %v233
    %v236 = vshrl.u32 %v218, %v234
    %v237 = vor.u32 %v235, %v236
    %v238 = vsub.s32 4294967266, %v233
    %v239 = vadd.s32 %v238, 127
    %v240 = vshll.u32 %v239, 23
    %v241 = vor.u32 4788187, %v240
    %v242 = vand.u32 2147483647, %v241
    %v244 = vcvt.s32.f32 %v237
    %v245 = vmul.f32 %v244, %v242
    %v246 = vxor.u32 %v245, 2147483648
    %v247 = vsel %vm164, %v246, %v245
    %v248 = vsub.s32 4, %v224
    %v249 = vsel %vm164, %v248, %v224
    %v250 = vsel %vm163, %v28, %v247
    %v251 = vsel %vm163, 0, %v249
    %v252 = vcosq.f32.pop %v250
    %v253 = vsinq.f32.pop %v250
    %vm254 = vweird.f32 %v28
    %v255 = vand.u32 %v251, 3
    %vm256 = vcmp.lt.s32.totalorder %v255, 2
    %vm257 = vcmp.eq.s32.totalorder %v255, 0
    %v258 = vxor.u32 %v253, 2147483648
    %v259 = vsel %vm257, %v252, %v258
    %vm260 = vcmp.eq.s32.totalorder %v255, 2
    %v261 = vxor.u32 %v252, 2147483648
    %v262 = vsel %vm260, %v261, %v253
    %v263 = vsel %vm256, %v259, %v262
    %v264 = vsel %vm254, nan, %v263
    %v265 = vand.u32 2147483647, %v29
    %vm266 = vcmp.le.f32.partialorder %v265, 0.7853982
    %vm267 = vcmp.lt.s32.totalorder %v29, 0
    %v268 = vand.u32 %v29, 2139095040
    %v269 = vshrl.u32 %v268, 23
    %v270 = vsub.s32 %v269, 127
    %v271 = vand.u32 2147483647, %v29
    %v272 = vand.u32 %v271, 8388607
    %v273 = vor.u32 %v272, 8388608
    %v274 = vsub.s32 0, %v273
    %v275 = vadd.s32 %v270, 1
    %vm276 = vcmp.gt.s32.totalorder %v275, 0
    %v277 = vsel %vm276, %v275, 0
    %v278 = vshrl.u32 %v277, 5
    %v279 = vand.u32 %v277, 31
    %v280 = vsub.s32 32, %v279
    %v281 = vshrl.u32 683565275, %v280
    %v282 = vshll.u32 683565275, %v279
    %v283 = vshrl.u32 2475754826, %v280
    %v284 = vor.u32 %v282, %v283
    %v285 = vshll.u32 2475754826, %v279
    %v286 = vshrl.u32 2131351028, %v280
    %v287 = vor.u32 %v285, %v286
    %v288 = vshll.u32 2131351028, %v279
    %v289 = vshrl.u32 2102212464, %v280
    %v290 = vor.u32 %v288, %v289
    %v291 = vshll.u32 2102212464, %v279
    %v292 = vshrl.u32 920167782, %v280
    %v293 = vor.u32 %v291, %v292
    %v294 = vshll.u32 920167782, %v279
    %v295 = vshrl.u32 1326507024, %v280
    %v296 = vor.u32 %v294, %v295
    %vm297 = vcmp.lt.s32.totalorder %v278, 1
    %vm298 = vcmp.lt.s32.totalorder %v278, 2
    %vm299 = vcmp.lt.s32.totalorder %v278, 3
    %vm300 = vcmp.lt.s32.totalorder %v278, 4
    %v301 = vsel %vm297, %v281, %v284
    %v302 = vsel %vm300, %v290, 2102212464
    %v303 = vsel %vm299, %v287, %v302
    %v304 = vsel %vm298, %v301, %v303
    %v305 = vsel %vm297, %v284, %v287
    %v306 = vsel %vm300, %v293, 920167782
    %v307 = vsel %vm299, %v290, %v306
    %v308 = vsel %vm298, %v305, %v307
    %v309 = vsel %vm297, %v287, %v290
    %v310 = vsel %vm300, %v296, 1326507024
    %v311 = vsel %vm299, %v293, %v310
    %v312 = vsel %vm298, %v309, %v311
    %v313 = vshll.u32 %v273, 8
    %v314 = vmul.u32.u64.compose %v313, %v312
    %v315 = vextract.low.u32 %v314
    %v316 = vextract.high.u32 %v314
    %v317 = vmul.u32.u64.compose %v313, %v308
    %v318 = vextract.low.u32 %v317
    %v319 = vextract.high.u32 %v317
    %v320 = vmul.u32 %v313, %v304
    %v321 = vadd.s32 %v316, %v318
    %vm322 = vc.u32 %v316, %v318
    %v323 = vadd.s32 %v319, 1
    %v324 = vsel %vm322, %v323, %v319
    %v325 = vadd.s32 %v320, %v324
    %v326 = vadd.s32 %v325, 536870912
    %v327 = vshrl.u32 %v326, 30
    %v328 = vshll.u32 %v327, 30
    %v329 = vsub.s32 %v325, %v328
    %vm330 = vcmp.lt.s32.totalorder %v329, 0
    %v331 = vsub.s32 0, %v329
    %v332 = vsel %vm330, %v331, %v329
    %v333 = vclz %v332
    %v334 = vsub.s32 %v333, 2
    %vm335 = vcmp.gt.s32.totalorder 0, %v334
    %v336 = vsel %vm335, 0, %v334
    %v337 = vsub.s32 32, %v336
    %v338 = vshll.u32 %v329, %v336
    %v339 = vshrl.u32 %v321, %v337
    %v340 = vor.u32 %v338, %v339
    %v341 = vsub.s32 4294967266, %v336
    %v342 = vadd.s32 %v341, 127
    %v343 = vshll.u32 %v342, 23
    %v344 = vor.u32 4788187, %v343
    %v345 = vand.u32 2147483647, %v344
    %v347 = vcvt.s32.f32 %v340
    %v348 = vmul.f32 %v347, %v345
    %v349 = vxor.u32 %v348, 2147483648
    %v350 = vsel %vm267, %v349, %v348
    %v351 = vsub.s32 4, %v327
    %v352 = vsel %vm267, %v351, %v327
    %v353 = vsel %vm266, %v29, %v350
    %v354 = vsel %vm266, 0, %v352
    %v355 = vcosq.f32.pop %v353
    %v356 = vsinq.f32.pop %v353
    %vm357 = vweird.f32 %v29
    %v358 = vand.u32 %v354, 3
    %vm359 = vcmp.lt.s32.totalorder %v358, 2
    %vm360 = vcmp.eq.s32.totalorder %v358, 0
    %v361 = vxor.u32 %v356, 2147483648
    %v362 = vsel %vm360, %v355, %v361
    %vm363 = vcmp.eq.s32.totalorder %v358, 2
    %v364 = vxor.u32 %v355, 2147483648
    %v365 = vsel %vm363, %v364, %v356
    %v366 = vsel %vm359, %v362, %v365
    %v367 = vsel %vm357, nan, %v366
    %v368 = vand.u32 2147483647, %v30
    %vm369 = vcmp.le.f32.partialorder %v368, 0.7853982
    %vm370 = vcmp.lt.s32.totalorder %v30, 0
    %v371 = vand.u32 %v30, 2139095040
    %v372 = vshrl.u32 %v371, 23
    %v373 = vsub.s32 %v372, 127
    %v374 = vand.u32 2147483647, %v30
    %v375 = vand.u32 %v374, 8388607
    %v376 = vor.u32 %v375, 8388608
    %v377 = vsub.s32 0, %v376
    %v378 = vadd.s32 %v373, 1
    %vm379 = vcmp.gt.s32.totalorder %v378, 0
    %v380 = vsel %vm379, %v378, 0
    %v381 = vshrl.u32 %v380, 5
    %v382 = vand.u32 %v380, 31
    %v383 = vsub.s32 32, %v382
    %v384 = vshrl.u32 683565275, %v383
    %v385 = vshll.u32 683565275, %v382
    %v386 = vshrl.u32 2475754826, %v383
    %v387 = vor.u32 %v385, %v386
    %v388 = vshll.u32 2475754826, %v382
    %v389 = vshrl.u32 2131351028, %v383
    %v390 = vor.u32 %v388, %v389
    %v391 = vshll.u32 2131351028, %v382
    %v392 = vshrl.u32 2102212464, %v383
    %v393 = vor.u32 %v391, %v392
    %v394 = vshll.u32 2102212464, %v382
    %v395 = vshrl.u32 920167782, %v383
    %v396 = vor.u32 %v394, %v395
    %v397 = vshll.u32 920167782, %v382
    %v398 = vshrl.u32 1326507024, %v383
    %v399 = vor.u32 %v397, %v398
    %vm400 = vcmp.lt.s32.totalorder %v381, 1
    %vm401 = vcmp.lt.s32.totalorder %v381, 2
    %vm402 = vcmp.lt.s32.totalorder %v381, 3
    %vm403 = vcmp.lt.s32.totalorder %v381, 4
    %v404 = vsel %vm400, %v384, %v387
    %v405 = vsel %vm403, %v393, 2102212464
    %v406 = vsel %vm402, %v390, %v405
    %v407 = vsel %vm401, %v404, %v406
    %v408 = vsel %vm400, %v387, %v390
    %v409 = vsel %vm403, %v396, 920167782
    %v410 = vsel %vm402, %v393, %v409
    %v411 = vsel %vm401, %v408, %v410
    %v412 = vsel %vm400, %v390, %v393
    %v413 = vsel %vm403, %v399, 1326507024
    %v414 = vsel %vm402, %v396, %v413
    %v415 = vsel %vm401, %v412, %v414
    %v416 = vshll.u32 %v376, 8
    %v417 = vmul.u32.u64.compose %v416, %v415
    %v418 = vextract.low.u32 %v417
    %v419 = vextract.high.u32 %v417
    %v420 = vmul.u32.u64.compose %v416, %v411
    %v421 = vextract.low.u32 %v420
    %v422 = vextract.high.u32 %v420
    %v423 = vmul.u32 %v416, %v407
    %v424 = vadd.s32 %v419, %v421
    %vm425 = vc.u32 %v419, %v421
    %v426 = vadd.s32 %v422, 1
    %v427 = vsel %vm425, %v426, %v422
    %v428 = vadd.s32 %v423, %v427
    %v429 = vadd.s32 %v428, 536870912
    %v430 = vshrl.u32 %v429, 30
    %v431 = vshll.u32 %v430, 30
    %v432 = vsub.s32 %v428, %v431
    %vm433 = vcmp.lt.s32.totalorder %v432, 0
    %v434 = vsub.s32 0, %v432
    %v435 = vsel %vm433, %v434, %v432
    %v436 = vclz %v435
    %v437 = vsub.s32 %v436, 2
    %vm438 = vcmp.gt.s32.totalorder 0, %v437
    %v439 = vsel %vm438, 0, %v437
    %v440 = vsub.s32 32, %v439
    %v441 = vshll.u32 %v432, %v439
    %v442 = vshrl.u32 %v424, %v440
    %v443 = vor.u32 %v441, %v442
    %v444 = vsub.s32 4294967266, %v439
    %v445 = vadd.s32 %v444, 127
    %v446 = vshll.u32 %v445, 23
    %v447 = vor.u32 4788187, %v446
    %v448 = vand.u32 2147483647, %v447
    %v450 = vcvt.s32.f32 %v443
    %v451 = vmul.f32 %v450, %v448
    %v452 = vxor.u32 %v451, 2147483648
    %v453 = vsel %vm370, %v452, %v451
    %v454 = vsub.s32 4, %v430
    %v455 = vsel %vm370, %v454, %v430
    %v456 = vsel %vm369, %v30, %v453
    %v457 = vsel %vm369, 0, %v455
    %v458 = vcosq.f32.pop %v456
    %v459 = vsinq.f32.pop %v456
    %vm460 = vweird.f32 %v30
    %v461 = vand.u32 %v457, 3
    %vm462 = vcmp.lt.s32.totalorder %v461, 2
    %vm463 = vcmp.eq.s32.totalorder %v461, 0
    %v464 = vxor.u32 %v459, 2147483648
    %v465 = vsel %vm463, %v458, %v464
    %vm466 = vcmp.eq.s32.totalorder %v461, 2
    %v467 = vxor.u32 %v458, 2147483648
    %v468 = vsel %vm466, %v467, %v459
    %v469 = vsel %vm462, %v465, %v468
    %v470 = vsel %vm460, nan, %v469
    %v471 = vand.u32 2147483647, %v31
    %vm472 = vcmp.le.f32.partialorder %v471, 0.7853982
    %vm473 = vcmp.lt.s32.totalorder %v31, 0
    %v474 = vand.u32 %v31, 2139095040
    %v475 = vshrl.u32 %v474, 23
    %v476 = vsub.s32 %v475, 127
    %v477 = vand.u32 2147483647, %v31
    %v478 = vand.u32 %v477, 8388607
    %v479 = vor.u32 %v478, 8388608
    %v480 = vsub.s32 0, %v479
    %v481 = vadd.s32 %v476, 1
    %vm482 = vcmp.gt.s32.totalorder %v481, 0
    %v483 = vsel %vm482, %v481, 0
    %v484 = vshrl.u32 %v483, 5
    %v485 = vand.u32 %v483, 31
    %v486 = vsub.s32 32, %v485
    %v487 = vshrl.u32 683565275, %v486
    %v488 = vshll.u32 683565275, %v485
    %v489 = vshrl.u32 2475754826, %v486
    %v490 = vor.u32 %v488, %v489
    %v491 = vshll.u32 2475754826, %v485
    %v492 = vshrl.u32 2131351028, %v486
    %v493 = vor.u32 %v491, %v492
    %v494 = vshll.u32 2131351028, %v485
    %v495 = vshrl.u32 2102212464, %v486
    %v496 = vor.u32 %v494, %v495
    %v497 = vshll.u32 2102212464, %v485
    %v498 = vshrl.u32 920167782, %v486
    %v499 = vor.u32 %v497, %v498
    %v500 = vshll.u32 920167782, %v485
    %v501 = vshrl.u32 1326507024, %v486
    %v502 = vor.u32 %v500, %v501
    %vm503 = vcmp.lt.s32.totalorder %v484, 1
    %vm504 = vcmp.lt.s32.totalorder %v484, 2
    %vm505 = vcmp.lt.s32.totalorder %v484, 3
    %vm506 = vcmp.lt.s32.totalorder %v484, 4
    %v507 = vsel %vm503, %v487, %v490
    %v508 = vsel %vm506, %v496, 2102212464
    %v509 = vsel %vm505, %v493, %v508
    %v510 = vsel %vm504, %v507, %v509
    %v511 = vsel %vm503, %v490, %v493
    %v512 = vsel %vm506, %v499, 920167782
    %v513 = vsel %vm505, %v496, %v512
    %v514 = vsel %vm504, %v511, %v513
    %v515 = vsel %vm503, %v493, %v496
    %v516 = vsel %vm506, %v502, 1326507024
    %v517 = vsel %vm505, %v499, %v516
    %v518 = vsel %vm504, %v515, %v517
    %v519 = vshll.u32 %v479, 8
    %v520 = vmul.u32.u64.compose %v519, %v518
    %v521 = vextract.low.u32 %v520
    %v522 = vextract.high.u32 %v520
    %v523 = vmul.u32.u64.compose %v519, %v514
    %v524 = vextract.low.u32 %v523
    %v525 = vextract.high.u32 %v523
    %v526 = vmul.u32 %v519, %v510
    %v527 = vadd.s32 %v522, %v524
    %vm528 = vc.u32 %v522, %v524
    %v529 = vadd.s32 %v525, 1
    %v530 = vsel %vm528, %v529, %v525
    %v531 = vadd.s32 %v526, %v530
    %v532 = vadd.s32 %v531, 536870912
    %v533 = vshrl.u32 %v532, 30
    %v534 = vshll.u32 %v533, 30
    %v535 = vsub.s32 %v531, %v534
    %vm536 = vcmp.lt.s32.totalorder %v535, 0
    %v537 = vsub.s32 0, %v535
    %v538 = vsel %vm536, %v537, %v535
    %v539 = vclz %v538
    %v540 = vsub.s32 %v539, 2
    %vm541 = vcmp.gt.s32.totalorder 0, %v540
    %v542 = vsel %vm541, 0, %v540
    %v543 = vsub.s32 32, %v542
    %v544 = vshll.u32 %v535, %v542
    %v545 = vshrl.u32 %v527, %v543
    %v546 = vor.u32 %v544, %v545
    %v547 = vsub.s32 4294967266, %v542
    %v548 = vadd.s32 %v547, 127
    %v549 = vshll.u32 %v548, 23
    %v550 = vor.u32 4788187, %v549
    %v551 = vand.u32 2147483647, %v550
    %v553 = vcvt.s32.f32 %v546
    %v554 = vmul.f32 %v553, %v551
    %v555 = vxor.u32 %v554, 2147483648
    %v556 = vsel %vm473, %v555, %v554
    %v557 = vsub.s32 4, %v533
    %v558 = vsel %vm473, %v557, %v533
    %v559 = vsel %vm472, %v31, %v556
    %v560 = vsel %vm472, 0, %v558
    %v561 = vcosq.f32.pop %v559
    %v562 = vsinq.f32.pop %v559
    %vm563 = vweird.f32 %v31
    %v564 = vand.u32 %v560, 3
    %vm565 = vcmp.lt.s32.totalorder %v564, 2
    %vm566 = vcmp.eq.s32.totalorder %v564, 0
    %v567 = vxor.u32 %v562, 2147483648
    %v568 = vsel %vm566, %v561, %v567
    %vm569 = vcmp.eq.s32.totalorder %v564, 2
    %v570 = vxor.u32 %v561, 2147483648
    %v571 = vsel %vm569, %v570, %v562
    %v572 = vsel %vm565, %v568, %v571
    %v573 = vsel %vm563, nan, %v572
    %v574 = vand.u32 2147483647, %v32
    %vm575 = vcmp.le.f32.partialorder %v574, 0.7853982
    %vm576 = vcmp.lt.s32.totalorder %v32, 0
    %v577 = vand.u32 %v32, 2139095040
    %v578 = vshrl.u32 %v577, 23
    %v579 = vsub.s32 %v578, 127
    %v580 = vand.u32 2147483647, %v32
    %v581 = vand.u32 %v580, 8388607
    %v582 = vor.u32 %v581, 8388608
    %v583 = vsub.s32 0, %v582
    %v584 = vadd.s32 %v579, 1
    %vm585 = vcmp.gt.s32.totalorder %v584, 0
    %v586 = vsel %vm585, %v584, 0
    %v587 = vshrl.u32 %v586, 5
    %v588 = vand.u32 %v586, 31
    %v589 = vsub.s32 32, %v588
    %v590 = vshrl.u32 683565275, %v589
    %v591 = vshll.u32 683565275, %v588
    %v592 = vshrl.u32 2475754826, %v589
    %v593 = vor.u32 %v591, %v592
    %v594 = vshll.u32 2475754826, %v588
    %v595 = vshrl.u32 2131351028, %v589
    %v596 = vor.u32 %v594, %v595
    %v597 = vshll.u32 2131351028, %v588
    %v598 = vshrl.u32 2102212464, %v589
    %v599 = vor.u32 %v597, %v598
    %v600 = vshll.u32 2102212464, %v588
    %v601 = vshrl.u32 920167782, %v589
    %v602 = vor.u32 %v600, %v601
    %v603 = vshll.u32 920167782, %v588
    %v604 = vshrl.u32 1326507024, %v589
    %v605 = vor.u32 %v603, %v604
    %vm606 = vcmp.lt.s32.totalorder %v587, 1
    %vm607 = vcmp.lt.s32.totalorder %v587, 2
    %vm608 = vcmp.lt.s32.totalorder %v587, 3
    %vm609 = vcmp.lt.s32.totalorder %v587, 4
    %v610 = vsel %vm606, %v590, %v593
    %v611 = vsel %vm609, %v599, 2102212464
    %v612 = vsel %vm608, %v596, %v611
    %v613 = vsel %vm607, %v610, %v612
    %v614 = vsel %vm606, %v593, %v596
    %v615 = vsel %vm609, %v602, 920167782
    %v616 = vsel %vm608, %v599, %v615
    %v617 = vsel %vm607, %v614, %v616
    %v618 = vsel %vm606, %v596, %v599
    %v619 = vsel %vm609, %v605, 1326507024
    %v620 = vsel %vm608, %v602, %v619
    %v621 = vsel %vm607, %v618, %v620
    %v622 = vshll.u32 %v582, 8
    %v623 = vmul.u32.u64.compose %v622, %v621
    %v624 = vextract.low.u32 %v623
    %v625 = vextract.high.u32 %v623
    %v626 = vmul.u32.u64.compose %v622, %v617
    %v627 = vextract.low.u32 %v626
    %v628 = vextract.high.u32 %v626
    %v629 = vmul.u32 %v622, %v613
    %v630 = vadd.s32 %v625, %v627
    %vm631 = vc.u32 %v625, %v627
    %v632 = vadd.s32 %v628, 1
    %v633 = vsel %vm631, %v632, %v628
    %v634 = vadd.s32 %v629, %v633
    %v635 = vadd.s32 %v634, 536870912
    %v636 = vshrl.u32 %v635, 30
    %v637 = vshll.u32 %v636, 30
    %v638 = vsub.s32 %v634, %v637
    %vm639 = vcmp.lt.s32.totalorder %v638, 0
    %v640 = vsub.s32 0, %v638
    %v641 = vsel %vm639, %v640, %v638
    %v642 = vclz %v641
    %v643 = vsub.s32 %v642, 2
    %vm644 = vcmp.gt.s32.totalorder 0, %v643
    %v645 = vsel %vm644, 0, %v643
    %v646 = vsub.s32 32, %v645
    %v647 = vshll.u32 %v638, %v645
    %v648 = vshrl.u32 %v630, %v646
    %v649 = vor.u32 %v647, %v648
    %v650 = vsub.s32 4294967266, %v645
    %v651 = vadd.s32 %v650, 127
    %v652 = vshll.u32 %v651, 23
    %v653 = vor.u32 4788187, %v652
    %v654 = vand.u32 2147483647, %v653
    %v656 = vcvt.s32.f32 %v649
    %v657 = vmul.f32 %v656, %v654
    %v658 = vxor.u32 %v657, 2147483648
    %v659 = vsel %vm576, %v658, %v657
    %v660 = vsub.s32 4, %v636
    %v661 = vsel %vm576, %v660, %v636
    %v662 = vsel %vm575, %v32, %v659
    %v663 = vsel %vm575, 0, %v661
    %v664 = vcosq.f32.pop %v662
    %v665 = vsinq.f32.pop %v662
    %vm666 = vweird.f32 %v32
    %v667 = vand.u32 %v663, 3
    %vm668 = vcmp.lt.s32.totalorder %v667, 2
    %vm669 = vcmp.eq.s32.totalorder %v667, 0
    %v670 = vxor.u32 %v665, 2147483648
    %v671 = vsel %vm669, %v664, %v670
    %vm672 = vcmp.eq.s32.totalorder %v667, 2
    %v673 = vxor.u32 %v664, 2147483648
    %v674 = vsel %vm672, %v673, %v665
    %v675 = vsel %vm668, %v671, %v674
    %v676 = vsel %vm666, nan, %v675
    %s677 = scalar_lea.vmem %s2, 48
    %678 = vst [vmem:[%s677] sm:$0xff] %v161
    %679 = vst [vmem:[%s677 + $0x8] sm:$0xff] %v264
    %680 = vst [vmem:[%s677 + $0x10] sm:$0xff] %v367
    %681 = vst [vmem:[%s677 + $0x18] sm:$0xff] %v470
    %682 = vst [vmem:[%s677 + $0x20] sm:$0xff] %v573
    %683 = vst [vmem:[%s677 + $0x28] sm:$0xff] %v676
    %v684 = vand.u32 2147483647, %v27
    %vm685 = vcmp.le.f32.partialorder %v684, 0.7853982
    %vm686 = vcmp.lt.s32.totalorder %v27, 0
    %v687 = vand.u32 %v27, 2139095040
    %v688 = vshrl.u32 %v687, 23
    %v689 = vsub.s32 %v688, 127
    %v690 = vand.u32 2147483647, %v27
    %v691 = vand.u32 %v690, 8388607
    %v692 = vor.u32 %v691, 8388608
    %v693 = vsub.s32 0, %v692
    %v694 = vadd.s32 %v689, 1
    %vm695 = vcmp.gt.s32.totalorder %v694, 0
    %v696 = vsel %vm695, %v694, 0
    %v697 = vshrl.u32 %v696, 5
    %v698 = vand.u32 %v696, 31
    %v699 = vsub.s32 32, %v698
    %v700 = vshrl.u32 683565275, %v699
    %v701 = vshll.u32 683565275, %v698
    %v702 = vshrl.u32 2475754826, %v699
    %v703 = vor.u32 %v701, %v702
    %v704 = vshll.u32 2475754826, %v698
    %v705 = vshrl.u32 2131351028, %v699
    %v706 = vor.u32 %v704, %v705
    %v707 = vshll.u32 2131351028, %v698
    %v708 = vshrl.u32 2102212464, %v699
    %v709 = vor.u32 %v707, %v708
    %v710 = vshll.u32 2102212464, %v698
    %v711 = vshrl.u32 920167782, %v699
    %v712 = vor.u32 %v710, %v711
    %v713 = vshll.u32 920167782, %v698
    %v714 = vshrl.u32 1326507024, %v699
    %v715 = vor.u32 %v713, %v714
    %vm716 = vcmp.lt.s32.totalorder %v697, 1
    %vm717 = vcmp.lt.s32.totalorder %v697, 2
    %vm718 = vcmp.lt.s32.totalorder %v697, 3
    %vm719 = vcmp.lt.s32.totalorder %v697, 4
    %v720 = vsel %vm716, %v700, %v703
    %v721 = vsel %vm719, %v709, 2102212464
    %v722 = vsel %vm718, %v706, %v721
    %v723 = vsel %vm717, %v720, %v722
    %v724 = vsel %vm716, %v703, %v706
    %v725 = vsel %vm719, %v712, 920167782
    %v726 = vsel %vm718, %v709, %v725
    %v727 = vsel %vm717, %v724, %v726
    %v728 = vsel %vm716, %v706, %v709
    %v729 = vsel %vm719, %v715, 1326507024
    %v730 = vsel %vm718, %v712, %v729
    %v731 = vsel %vm717, %v728, %v730
    %v732 = vshll.u32 %v692, 8
    %v733 = vmul.u32.u64.compose %v732, %v731
    %v734 = vextract.low.u32 %v733
    %v735 = vextract.high.u32 %v733
    %v736 = vmul.u32.u64.compose %v732, %v727
    %v737 = vextract.low.u32 %v736
    %v738 = vextract.high.u32 %v736
    %v739 = vmul.u32 %v732, %v723
    %v740 = vadd.s32 %v735, %v737
    %vm741 = vc.u32 %v735, %v737
    %v742 = vadd.s32 %v738, 1
    %v743 = vsel %vm741, %v742, %v738
    %v744 = vadd.s32 %v739, %v743
    %v745 = vadd.s32 %v744, 536870912
    %v746 = vshrl.u32 %v745, 30
    %v747 = vshll.u32 %v746, 30
    %v748 = vsub.s32 %v744, %v747
    %vm749 = vcmp.lt.s32.totalorder %v748, 0
    %v750 = vsub.s32 0, %v748
    %v751 = vsel %vm749, %v750, %v748
    %v752 = vclz %v751
    %v753 = vsub.s32 %v752, 2
    %vm754 = vcmp.gt.s32.totalorder 0, %v753
    %v755 = vsel %vm754, 0, %v753
    %v756 = vsub.s32 32, %v755
    %v757 = vshll.u32 %v748, %v755
    %v758 = vshrl.u32 %v740, %v756
    %v759 = vor.u32 %v757, %v758
    %v760 = vsub.s32 4294967266, %v755
    %v761 = vadd.s32 %v760, 127
    %v762 = vshll.u32 %v761, 23
    %v763 = vor.u32 4788187, %v762
    %v764 = vand.u32 2147483647, %v763
    %v766 = vcvt.s32.f32 %v759
    %v767 = vmul.f32 %v766, %v764
    %v768 = vxor.u32 %v767, 2147483648
    %v769 = vsel %vm686, %v768, %v767
    %v770 = vsub.s32 4, %v746
    %v771 = vsel %vm686, %v770, %v746
    %v772 = vsel %vm685, %v27, %v769
    %v773 = vsel %vm685, 0, %v771
    %v774 = vcosq.f32.pop %v772
    %v775 = vsinq.f32.pop %v772
    %vm776 = vweird.f32 %v27
    %v777 = vadd.s32 %v773, 3
    %v778 = vand.u32 %v777, 3
    %vm779 = vcmp.lt.s32.totalorder %v778, 2
    %vm780 = vcmp.eq.s32.totalorder %v778, 0
    %v781 = vxor.u32 %v775, 2147483648
    %v782 = vsel %vm780, %v774, %v781
    %vm783 = vcmp.eq.s32.totalorder %v778, 2
    %v784 = vxor.u32 %v774, 2147483648
    %v785 = vsel %vm783, %v784, %v775
    %v786 = vsel %vm779, %v782, %v785
    %v787 = vsel %vm776, nan, %v786
    %v788 = vand.u32 2147483647, %v28
    %vm789 = vcmp.le.f32.partialorder %v788, 0.7853982
    %vm790 = vcmp.lt.s32.totalorder %v28, 0
    %v791 = vand.u32 %v28, 2139095040
    %v792 = vshrl.u32 %v791, 23
    %v793 = vsub.s32 %v792, 127
    %v794 = vand.u32 2147483647, %v28
    %v795 = vand.u32 %v794, 8388607
    %v796 = vor.u32 %v795, 8388608
    %v797 = vsub.s32 0, %v796
    %v798 = vadd.s32 %v793, 1
    %vm799 = vcmp.gt.s32.totalorder %v798, 0
    %v800 = vsel %vm799, %v798, 0
    %v801 = vshrl.u32 %v800, 5
    %v802 = vand.u32 %v800, 31
    %v803 = vsub.s32 32, %v802
    %v804 = vshrl.u32 683565275, %v803
    %v805 = vshll.u32 683565275, %v802
    %v806 = vshrl.u32 2475754826, %v803
    %v807 = vor.u32 %v805, %v806
    %v808 = vshll.u32 2475754826, %v802
    %v809 = vshrl.u32 2131351028, %v803
    %v810 = vor.u32 %v808, %v809
    %v811 = vshll.u32 2131351028, %v802
    %v812 = vshrl.u32 2102212464, %v803
    %v813 = vor.u32 %v811, %v812
    %v814 = vshll.u32 2102212464, %v802
    %v815 = vshrl.u32 920167782, %v803
    %v816 = vor.u32 %v814, %v815
    %v817 = vshll.u32 920167782, %v802
    %v818 = vshrl.u32 1326507024, %v803
    %v819 = vor.u32 %v817, %v818
    %vm820 = vcmp.lt.s32.totalorder %v801, 1
    %vm821 = vcmp.lt.s32.totalorder %v801, 2
    %vm822 = vcmp.lt.s32.totalorder %v801, 3
    %vm823 = vcmp.lt.s32.totalorder %v801, 4
    %v824 = vsel %vm820, %v804, %v807
    %v825 = vsel %vm823, %v813, 2102212464
    %v826 = vsel %vm822, %v810, %v825
    %v827 = vsel %vm821, %v824, %v826
    %v828 = vsel %vm820, %v807, %v810
    %v829 = vsel %vm823, %v816, 920167782
    %v830 = vsel %vm822, %v813, %v829
    %v831 = vsel %vm821, %v828, %v830
    %v832 = vsel %vm820, %v810, %v813
    %v833 = vsel %vm823, %v819, 1326507024
    %v834 = vsel %vm822, %v816, %v833
    %v835 = vsel %vm821, %v832, %v834
    %v836 = vshll.u32 %v796, 8
    %v837 = vmul.u32.u64.compose %v836, %v835
    %v838 = vextract.low.u32 %v837
    %v839 = vextract.high.u32 %v837
    %v840 = vmul.u32.u64.compose %v836, %v831
    %v841 = vextract.low.u32 %v840
    %v842 = vextract.high.u32 %v840
    %v843 = vmul.u32 %v836, %v827
    %v844 = vadd.s32 %v839, %v841
    %vm845 = vc.u32 %v839, %v841
    %v846 = vadd.s32 %v842, 1
    %v847 = vsel %vm845, %v846, %v842
    %v848 = vadd.s32 %v843, %v847
    %v849 = vadd.s32 %v848, 536870912
    %v850 = vshrl.u32 %v849, 30
    %v851 = vshll.u32 %v850, 30
    %v852 = vsub.s32 %v848, %v851
    %vm853 = vcmp.lt.s32.totalorder %v852, 0
    %v854 = vsub.s32 0, %v852
    %v855 = vsel %vm853, %v854, %v852
    %v856 = vclz %v855
    %v857 = vsub.s32 %v856, 2
    %vm858 = vcmp.gt.s32.totalorder 0, %v857
    %v859 = vsel %vm858, 0, %v857
    %v860 = vsub.s32 32, %v859
    %v861 = vshll.u32 %v852, %v859
    %v862 = vshrl.u32 %v844, %v860
    %v863 = vor.u32 %v861, %v862
    %v864 = vsub.s32 4294967266, %v859
    %v865 = vadd.s32 %v864, 127
    %v866 = vshll.u32 %v865, 23
    %v867 = vor.u32 4788187, %v866
    %v868 = vand.u32 2147483647, %v867
    %v870 = vcvt.s32.f32 %v863
    %v871 = vmul.f32 %v870, %v868
    %v872 = vxor.u32 %v871, 2147483648
    %v873 = vsel %vm790, %v872, %v871
    %v874 = vsub.s32 4, %v850
    %v875 = vsel %vm790, %v874, %v850
    %v876 = vsel %vm789, %v28, %v873
    %v877 = vsel %vm789, 0, %v875
    %v878 = vcosq.f32.pop %v876
    %v879 = vsinq.f32.pop %v876
    %vm880 = vweird.f32 %v28
    %v881 = vadd.s32 %v877, 3
    %v882 = vand.u32 %v881, 3
    %vm883 = vcmp.lt.s32.totalorder %v882, 2
    %vm884 = vcmp.eq.s32.totalorder %v882, 0
    %v885 = vxor.u32 %v879, 2147483648
    %v886 = vsel %vm884, %v878, %v885
    %vm887 = vcmp.eq.s32.totalorder %v882, 2
    %v888 = vxor.u32 %v878, 2147483648
    %v889 = vsel %vm887, %v888, %v879
    %v890 = vsel %vm883, %v886, %v889
    %v891 = vsel %vm880, nan, %v890
    %v892 = vand.u32 2147483647, %v29
    %vm893 = vcmp.le.f32.partialorder %v892, 0.7853982
    %vm894 = vcmp.lt.s32.totalorder %v29, 0
    %v895 = vand.u32 %v29, 2139095040
    %v896 = vshrl.u32 %v895, 23
    %v897 = vsub.s32 %v896, 127
    %v898 = vand.u32 2147483647, %v29
    %v899 = vand.u32 %v898, 8388607
    %v900 = vor.u32 %v899, 8388608
    %v901 = vsub.s32 0, %v900
    %v902 = vadd.s32 %v897, 1
    %vm903 = vcmp.gt.s32.totalorder %v902, 0
    %v904 = vsel %vm903, %v902, 0
    %v905 = vshrl.u32 %v904, 5
    %v906 = vand.u32 %v904, 31
    %v907 = vsub.s32 32, %v906
    %v908 = vshrl.u32 683565275, %v907
    %v909 = vshll.u32 683565275, %v906
    %v910 = vshrl.u32 2475754826, %v907
    %v911 = vor.u32 %v909, %v910
    %v912 = vshll.u32 2475754826, %v906
    %v913 = vshrl.u32 2131351028, %v907
    %v914 = vor.u32 %v912, %v913
    %v915 = vshll.u32 2131351028, %v906
    %v916 = vshrl.u32 2102212464, %v907
    %v917 = vor.u32 %v915, %v916
    %v918 = vshll.u32 2102212464, %v906
    %v919 = vshrl.u32 920167782, %v907
    %v920 = vor.u32 %v918, %v919
    %v921 = vshll.u32 920167782, %v906
    %v922 = vshrl.u32 1326507024, %v907
    %v923 = vor.u32 %v921, %v922
    %vm924 = vcmp.lt.s32.totalorder %v905, 1
    %vm925 = vcmp.lt.s32.totalorder %v905, 2
    %vm926 = vcmp.lt.s32.totalorder %v905, 3
    %vm927 = vcmp.lt.s32.totalorder %v905, 4
    %v928 = vsel %vm924, %v908, %v911
    %v929 = vsel %vm927, %v917, 2102212464
    %v930 = vsel %vm926, %v914, %v929
    %v931 = vsel %vm925, %v928, %v930
    %v932 = vsel %vm924, %v911, %v914
    %v933 = vsel %vm927, %v920, 920167782
    %v934 = vsel %vm926, %v917, %v933
    %v935 = vsel %vm925, %v932, %v934
    %v936 = vsel %vm924, %v914, %v917
    %v937 = vsel %vm927, %v923, 1326507024
    %v938 = vsel %vm926, %v920, %v937
    %v939 = vsel %vm925, %v936, %v938
    %v940 = vshll.u32 %v900, 8
    %v941 = vmul.u32.u64.compose %v940, %v939
    %v942 = vextract.low.u32 %v941
    %v943 = vextract.high.u32 %v941
    %v944 = vmul.u32.u64.compose %v940, %v935
    %v945 = vextract.low.u32 %v944
    %v946 = vextract.high.u32 %v944
    %v947 = vmul.u32 %v940, %v931
    %v948 = vadd.s32 %v943, %v945
    %vm949 = vc.u32 %v943, %v945
    %v950 = vadd.s32 %v946, 1
    %v951 = vsel %vm949, %v950, %v946
    %v952 = vadd.s32 %v947, %v951
    %v953 = vadd.s32 %v952, 536870912
    %v954 = vshrl.u32 %v953, 30
    %v955 = vshll.u32 %v954, 30
    %v956 = vsub.s32 %v952, %v955
    %vm957 = vcmp.lt.s32.totalorder %v956, 0
    %v958 = vsub.s32 0, %v956
    %v959 = vsel %vm957, %v958, %v956
    %v960 = vclz %v959
    %v961 = vsub.s32 %v960, 2
    %vm962 = vcmp.gt.s32.totalorder 0, %v961
    %v963 = vsel %vm962, 0, %v961
    %v964 = vsub.s32 32, %v963
    %v965 = vshll.u32 %v956, %v963
    %v966 = vshrl.u32 %v948, %v964
    %v967 = vor.u32 %v965, %v966
    %v968 = vsub.s32 4294967266, %v963
    %v969 = vadd.s32 %v968, 127
    %v970 = vshll.u32 %v969, 23
    %v971 = vor.u32 4788187, %v970
    %v972 = vand.u32 2147483647, %v971
    %v974 = vcvt.s32.f32 %v967
    %v975 = vmul.f32 %v974, %v972
    %v976 = vxor.u32 %v975, 2147483648
    %v977 = vsel %vm894, %v976, %v975
    %v978 = vsub.s32 4, %v954
    %v979 = vsel %vm894, %v978, %v954
    %v980 = vsel %vm893, %v29, %v977
    %v981 = vsel %vm893, 0, %v979
    %v982 = vcosq.f32.pop %v980
    %v983 = vsinq.f32.pop %v980
    %vm984 = vweird.f32 %v29
    %v985 = vadd.s32 %v981, 3
    %v986 = vand.u32 %v985, 3
    %vm987 = vcmp.lt.s32.totalorder %v986, 2
    %vm988 = vcmp.eq.s32.totalorder %v986, 0
    %v989 = vxor.u32 %v983, 2147483648
    %v990 = vsel %vm988, %v982, %v989
    %vm991 = vcmp.eq.s32.totalorder %v986, 2
    %v992 = vxor.u32 %v982, 2147483648
    %v993 = vsel %vm991, %v992, %v983
    %v994 = vsel %vm987, %v990, %v993
    %v995 = vsel %vm984, nan, %v994
    %v996 = vand.u32 2147483647, %v30
    %vm997 = vcmp.le.f32.partialorder %v996, 0.7853982
    %vm998 = vcmp.lt.s32.totalorder %v30, 0
    %v999 = vand.u32 %v30, 2139095040
    %v1000 = vshrl.u32 %v999, 23
    %v1001 = vsub.s32 %v1000, 127
    %v1002 = vand.u32 2147483647, %v30
    %v1003 = vand.u32 %v1002, 8388607
    %v1004 = vor.u32 %v1003, 8388608
    %v1005 = vsub.s32 0, %v1004
    %v1006 = vadd.s32 %v1001, 1
    %vm1007 = vcmp.gt.s32.totalorder %v1006, 0
    %v1008 = vsel %vm1007, %v1006, 0
    %v1009 = vshrl.u32 %v1008, 5
    %v1010 = vand.u32 %v1008, 31
    %v1011 = vsub.s32 32, %v1010
    %v1012 = vshrl.u32 683565275, %v1011
    %v1013 = vshll.u32 683565275, %v1010
    %v1014 = vshrl.u32 2475754826, %v1011
    %v1015 = vor.u32 %v1013, %v1014
    %v1016 = vshll.u32 2475754826, %v1010
    %v1017 = vshrl.u32 2131351028, %v1011
    %v1018 = vor.u32 %v1016, %v1017
    %v1019 = vshll.u32 2131351028, %v1010
    %v1020 = vshrl.u32 2102212464, %v1011
    %v1021 = vor.u32 %v1019, %v1020
    %v1022 = vshll.u32 2102212464, %v1010
    %v1023 = vshrl.u32 920167782, %v1011
    %v1024 = vor.u32 %v1022, %v1023
    %v1025 = vshll.u32 920167782, %v1010
    %v1026 = vshrl.u32 1326507024, %v1011
    %v1027 = vor.u32 %v1025, %v1026
    %vm1028 = vcmp.lt.s32.totalorder %v1009, 1
    %vm1029 = vcmp.lt.s32.totalorder %v1009, 2
    %vm1030 = vcmp.lt.s32.totalorder %v1009, 3
    %vm1031 = vcmp.lt.s32.totalorder %v1009, 4
    %v1032 = vsel %vm1028, %v1012, %v1015
    %v1033 = vsel %vm1031, %v1021, 2102212464
    %v1034 = vsel %vm1030, %v1018, %v1033
    %v1035 = vsel %vm1029, %v1032, %v1034
    %v1036 = vsel %vm1028, %v1015, %v1018
    %v1037 = vsel %vm1031, %v1024, 920167782
    %v1038 = vsel %vm1030, %v1021, %v1037
    %v1039 = vsel %vm1029, %v1036, %v1038
    %v1040 = vsel %vm1028, %v1018, %v1021
    %v1041 = vsel %vm1031, %v1027, 1326507024
    %v1042 = vsel %vm1030, %v1024, %v1041
    %v1043 = vsel %vm1029, %v1040, %v1042
    %v1044 = vshll.u32 %v1004, 8
    %v1045 = vmul.u32.u64.compose %v1044, %v1043
    %v1046 = vextract.low.u32 %v1045
    %v1047 = vextract.high.u32 %v1045
    %v1048 = vmul.u32.u64.compose %v1044, %v1039
    %v1049 = vextract.low.u32 %v1048
    %v1050 = vextract.high.u32 %v1048
    %v1051 = vmul.u32 %v1044, %v1035
    %v1052 = vadd.s32 %v1047, %v1049
    %vm1053 = vc.u32 %v1047, %v1049
    %v1054 = vadd.s32 %v1050, 1
    %v1055 = vsel %vm1053, %v1054, %v1050
    %v1056 = vadd.s32 %v1051, %v1055
    %v1057 = vadd.s32 %v1056, 536870912
    %v1058 = vshrl.u32 %v1057, 30
    %v1059 = vshll.u32 %v1058, 30
    %v1060 = vsub.s32 %v1056, %v1059
    %vm1061 = vcmp.lt.s32.totalorder %v1060, 0
    %v1062 = vsub.s32 0, %v1060
    %v1063 = vsel %vm1061, %v1062, %v1060
    %v1064 = vclz %v1063
    %v1065 = vsub.s32 %v1064, 2
    %vm1066 = vcmp.gt.s32.totalorder 0, %v1065
    %v1067 = vsel %vm1066, 0, %v1065
    %v1068 = vsub.s32 32, %v1067
    %v1069 = vshll.u32 %v1060, %v1067
    %v1070 = vshrl.u32 %v1052, %v1068
    %v1071 = vor.u32 %v1069, %v1070
    %v1072 = vsub.s32 4294967266, %v1067
    %v1073 = vadd.s32 %v1072, 127
    %v1074 = vshll.u32 %v1073, 23
    %v1075 = vor.u32 4788187, %v1074
    %v1076 = vand.u32 2147483647, %v1075
    %v1078 = vcvt.s32.f32 %v1071
    %v1079 = vmul.f32 %v1078, %v1076
    %v1080 = vxor.u32 %v1079, 2147483648
    %v1081 = vsel %vm998, %v1080, %v1079
    %v1082 = vsub.s32 4, %v1058
    %v1083 = vsel %vm998, %v1082, %v1058
    %v1084 = vsel %vm997, %v30, %v1081
    %v1085 = vsel %vm997, 0, %v1083
    %v1086 = vcosq.f32.pop %v1084
    %v1087 = vsinq.f32.pop %v1084
    %vm1088 = vweird.f32 %v30
    %v1089 = vadd.s32 %v1085, 3
    %v1090 = vand.u32 %v1089, 3
    %vm1091 = vcmp.lt.s32.totalorder %v1090, 2
    %vm1092 = vcmp.eq.s32.totalorder %v1090, 0
    %v1093 = vxor.u32 %v1087, 2147483648
    %v1094 = vsel %vm1092, %v1086, %v1093
    %vm1095 = vcmp.eq.s32.totalorder %v1090, 2
    %v1096 = vxor.u32 %v1086, 2147483648
    %v1097 = vsel %vm1095, %v1096, %v1087
    %v1098 = vsel %vm1091, %v1094, %v1097
    %v1099 = vsel %vm1088, nan, %v1098
    %v1100 = vand.u32 2147483647, %v31
    %vm1101 = vcmp.le.f32.partialorder %v1100, 0.7853982
    %vm1102 = vcmp.lt.s32.totalorder %v31, 0
    %v1103 = vand.u32 %v31, 2139095040
    %v1104 = vshrl.u32 %v1103, 23
    %v1105 = vsub.s32 %v1104, 127
    %v1106 = vand.u32 2147483647, %v31
    %v1107 = vand.u32 %v1106, 8388607
    %v1108 = vor.u32 %v1107, 8388608
    %v1109 = vsub.s32 0, %v1108
    %v1110 = vadd.s32 %v1105, 1
    %vm1111 = vcmp.gt.s32.totalorder %v1110, 0
    %v1112 = vsel %vm1111, %v1110, 0
    %v1113 = vshrl.u32 %v1112, 5
    %v1114 = vand.u32 %v1112, 31
    %v1115 = vsub.s32 32, %v1114
    %v1116 = vshrl.u32 683565275, %v1115
    %v1117 = vshll.u32 683565275, %v1114
    %v1118 = vshrl.u32 2475754826, %v1115
    %v1119 = vor.u32 %v1117, %v1118
    %v1120 = vshll.u32 2475754826, %v1114
    %v1121 = vshrl.u32 2131351028, %v1115
    %v1122 = vor.u32 %v1120, %v1121
    %v1123 = vshll.u32 2131351028, %v1114
    %v1124 = vshrl.u32 2102212464, %v1115
    %v1125 = vor.u32 %v1123, %v1124
    %v1126 = vshll.u32 2102212464, %v1114
    %v1127 = vshrl.u32 920167782, %v1115
    %v1128 = vor.u32 %v1126, %v1127
    %v1129 = vshll.u32 920167782, %v1114
    %v1130 = vshrl.u32 1326507024, %v1115
    %v1131 = vor.u32 %v1129, %v1130
    %vm1132 = vcmp.lt.s32.totalorder %v1113, 1
    %vm1133 = vcmp.lt.s32.totalorder %v1113, 2
    %vm1134 = vcmp.lt.s32.totalorder %v1113, 3
    %vm1135 = vcmp.lt.s32.totalorder %v1113, 4
    %v1136 = vsel %vm1132, %v1116, %v1119
    %v1137 = vsel %vm1135, %v1125, 2102212464
    %v1138 = vsel %vm1134, %v1122, %v1137
    %v1139 = vsel %vm1133, %v1136, %v1138
    %v1140 = vsel %vm1132, %v1119, %v1122
    %v1141 = vsel %vm1135, %v1128, 920167782
    %v1142 = vsel %vm1134, %v1125, %v1141
    %v1143 = vsel %vm1133, %v1140, %v1142
    %v1144 = vsel %vm1132, %v1122, %v1125
    %v1145 = vsel %vm1135, %v1131, 1326507024
    %v1146 = vsel %vm1134, %v1128, %v1145
    %v1147 = vsel %vm1133, %v1144, %v1146
    %v1148 = vshll.u32 %v1108, 8
    %v1149 = vmul.u32.u64.compose %v1148, %v1147
    %v1150 = vextract.low.u32 %v1149
    %v1151 = vextract.high.u32 %v1149
    %v1152 = vmul.u32.u64.compose %v1148, %v1143
    %v1153 = vextract.low.u32 %v1152
    %v1154 = vextract.high.u32 %v1152
    %v1155 = vmul.u32 %v1148, %v1139
    %v1156 = vadd.s32 %v1151, %v1153
    %vm1157 = vc.u32 %v1151, %v1153
    %v1158 = vadd.s32 %v1154, 1
    %v1159 = vsel %vm1157, %v1158, %v1154
    %v1160 = vadd.s32 %v1155, %v1159
    %v1161 = vadd.s32 %v1160, 536870912
    %v1162 = vshrl.u32 %v1161, 30
    %v1163 = vshll.u32 %v1162, 30
    %v1164 = vsub.s32 %v1160, %v1163
    %vm1165 = vcmp.lt.s32.totalorder %v1164, 0
    %v1166 = vsub.s32 0, %v1164
    %v1167 = vsel %vm1165, %v1166, %v1164
    %v1168 = vclz %v1167
    %v1169 = vsub.s32 %v1168, 2
    %vm1170 = vcmp.gt.s32.totalorder 0, %v1169
    %v1171 = vsel %vm1170, 0, %v1169
    %v1172 = vsub.s32 32, %v1171
    %v1173 = vshll.u32 %v1164, %v1171
    %v1174 = vshrl.u32 %v1156, %v1172
    %v1175 = vor.u32 %v1173, %v1174
    %v1176 = vsub.s32 4294967266, %v1171
    %v1177 = vadd.s32 %v1176, 127
    %v1178 = vshll.u32 %v1177, 23
    %v1179 = vor.u32 4788187, %v1178
    %v1180 = vand.u32 2147483647, %v1179
    %v1182 = vcvt.s32.f32 %v1175
    %v1183 = vmul.f32 %v1182, %v1180
    %v1184 = vxor.u32 %v1183, 2147483648
    %v1185 = vsel %vm1102, %v1184, %v1183
    %v1186 = vsub.s32 4, %v1162
    %v1187 = vsel %vm1102, %v1186, %v1162
    %v1188 = vsel %vm1101, %v31, %v1185
    %v1189 = vsel %vm1101, 0, %v1187
    %v1190 = vcosq.f32.pop %v1188
    %v1191 = vsinq.f32.pop %v1188
    %vm1192 = vweird.f32 %v31
    %v1193 = vadd.s32 %v1189, 3
    %v1194 = vand.u32 %v1193, 3
    %vm1195 = vcmp.lt.s32.totalorder %v1194, 2
    %vm1196 = vcmp.eq.s32.totalorder %v1194, 0
    %v1197 = vxor.u32 %v1191, 2147483648
    %v1198 = vsel %vm1196, %v1190, %v1197
    %vm1199 = vcmp.eq.s32.totalorder %v1194, 2
    %v1200 = vxor.u32 %v1190, 2147483648
    %v1201 = vsel %vm1199, %v1200, %v1191
    %v1202 = vsel %vm1195, %v1198, %v1201
    %v1203 = vsel %vm1192, nan, %v1202
    %v1204 = vand.u32 2147483647, %v32
    %vm1205 = vcmp.le.f32.partialorder %v1204, 0.7853982
    %vm1206 = vcmp.lt.s32.totalorder %v32, 0
    %v1207 = vand.u32 %v32, 2139095040
    %v1208 = vshrl.u32 %v1207, 23
    %v1209 = vsub.s32 %v1208, 127
    %v1210 = vand.u32 2147483647, %v32
    %v1211 = vand.u32 %v1210, 8388607
    %v1212 = vor.u32 %v1211, 8388608
    %v1213 = vsub.s32 0, %v1212
    %v1214 = vadd.s32 %v1209, 1
    %vm1215 = vcmp.gt.s32.totalorder %v1214, 0
    %v1216 = vsel %vm1215, %v1214, 0
    %v1217 = vshrl.u32 %v1216, 5
    %v1218 = vand.u32 %v1216, 31
    %v1219 = vsub.s32 32, %v1218
    %v1220 = vshrl.u32 683565275, %v1219
    %v1221 = vshll.u32 683565275, %v1218
    %v1222 = vshrl.u32 2475754826, %v1219
    %v1223 = vor.u32 %v1221, %v1222
    %v1224 = vshll.u32 2475754826, %v1218
    %v1225 = vshrl.u32 2131351028, %v1219
    %v1226 = vor.u32 %v1224, %v1225
    %v1227 = vshll.u32 2131351028, %v1218
    %v1228 = vshrl.u32 2102212464, %v1219
    %v1229 = vor.u32 %v1227, %v1228
    %v1230 = vshll.u32 2102212464, %v1218
    %v1231 = vshrl.u32 920167782, %v1219
    %v1232 = vor.u32 %v1230, %v1231
    %v1233 = vshll.u32 920167782, %v1218
    %v1234 = vshrl.u32 1326507024, %v1219
    %v1235 = vor.u32 %v1233, %v1234
    %vm1236 = vcmp.lt.s32.totalorder %v1217, 1
    %vm1237 = vcmp.lt.s32.totalorder %v1217, 2
    %vm1238 = vcmp.lt.s32.totalorder %v1217, 3
    %vm1239 = vcmp.lt.s32.totalorder %v1217, 4
    %v1240 = vsel %vm1236, %v1220, %v1223
    %v1241 = vsel %vm1239, %v1229, 2102212464
    %v1242 = vsel %vm1238, %v1226, %v1241
    %v1243 = vsel %vm1237, %v1240, %v1242
    %v1244 = vsel %vm1236, %v1223, %v1226
    %v1245 = vsel %vm1239, %v1232, 920167782
    %v1246 = vsel %vm1238, %v1229, %v1245
    %v1247 = vsel %vm1237, %v1244, %v1246
    %v1248 = vsel %vm1236, %v1226, %v1229
    %v1249 = vsel %vm1239, %v1235, 1326507024
    %v1250 = vsel %vm1238, %v1232, %v1249
    %v1251 = vsel %vm1237, %v1248, %v1250
    %v1252 = vshll.u32 %v1212, 8
    %v1253 = vmul.u32.u64.compose %v1252, %v1251
    %v1254 = vextract.low.u32 %v1253
    %v1255 = vextract.high.u32 %v1253
    %v1256 = vmul.u32.u64.compose %v1252, %v1247
    %v1257 = vextract.low.u32 %v1256
    %v1258 = vextract.high.u32 %v1256
    %v1259 = vmul.u32 %v1252, %v1243
    %v1260 = vadd.s32 %v1255, %v1257
    %vm1261 = vc.u32 %v1255, %v1257
    %v1262 = vadd.s32 %v1258, 1
    %v1263 = vsel %vm1261, %v1262, %v1258
    %v1264 = vadd.s32 %v1259, %v1263
    %v1265 = vadd.s32 %v1264, 536870912
    %v1266 = vshrl.u32 %v1265, 30
    %v1267 = vshll.u32 %v1266, 30
    %v1268 = vsub.s32 %v1264, %v1267
    %vm1269 = vcmp.lt.s32.totalorder %v1268, 0
    %v1270 = vsub.s32 0, %v1268
    %v1271 = vsel %vm1269, %v1270, %v1268
    %v1272 = vclz %v1271
    %v1273 = vsub.s32 %v1272, 2
    %vm1274 = vcmp.gt.s32.totalorder 0, %v1273
    %v1275 = vsel %vm1274, 0, %v1273
    %v1276 = vsub.s32 32, %v1275
    %v1277 = vshll.u32 %v1268, %v1275
    %v1278 = vshrl.u32 %v1260, %v1276
    %v1279 = vor.u32 %v1277, %v1278
    %v1280 = vsub.s32 4294967266, %v1275
    %v1281 = vadd.s32 %v1280, 127
    %v1282 = vshll.u32 %v1281, 23
    %v1283 = vor.u32 4788187, %v1282
    %v1284 = vand.u32 2147483647, %v1283
    %v1286 = vcvt.s32.f32 %v1279
    %v1287 = vmul.f32 %v1286, %v1284
    %v1288 = vxor.u32 %v1287, 2147483648
    %v1289 = vsel %vm1206, %v1288, %v1287
    %v1290 = vsub.s32 4, %v1266
    %v1291 = vsel %vm1206, %v1290, %v1266
    %v1292 = vsel %vm1205, %v32, %v1289
    %v1293 = vsel %vm1205, 0, %v1291
    %v1294 = vcosq.f32.pop %v1292
    %v1295 = vsinq.f32.pop %v1292
    %vm1296 = vweird.f32 %v32
    %v1297 = vadd.s32 %v1293, 3
    %v1298 = vand.u32 %v1297, 3
    %vm1299 = vcmp.lt.s32.totalorder %v1298, 2
    %vm1300 = vcmp.eq.s32.totalorder %v1298, 0
    %v1301 = vxor.u32 %v1295, 2147483648
    %v1302 = vsel %vm1300, %v1294, %v1301
    %vm1303 = vcmp.eq.s32.totalorder %v1298, 2
    %v1304 = vxor.u32 %v1294, 2147483648
    %v1305 = vsel %vm1303, %v1304, %v1295
    %v1306 = vsel %vm1299, %v1302, %v1305
    %v1307 = vsel %vm1296, nan, %v1306
    %s1308 = scalar_lea.vmem %s2, 96
    %1309 = vst [vmem:[%s1308] sm:$0xff] %v787
    %1310 = vst [vmem:[%s1308 + $0x8] sm:$0xff] %v891
    %1311 = vst [vmem:[%s1308 + $0x10] sm:$0xff] %v995
    %1312 = vst [vmem:[%s1308 + $0x18] sm:$0xff] %v1099
    %1313 = vst [vmem:[%s1308 + $0x20] sm:$0xff] %v1203
    %1314 = vst [vmem:[%s1308 + $0x28] sm:$0xff] %v1307
    // Predicated region
    $region14: #{wind_input_forward.1} parent=1 // pred_check
      _
    $region15: #{wind_input_forward.1} parent=1 // pred_check_branch
      %1316 = sbr.rel (0) target = $region17
    $region16: #{wind_input_forward.1} parent=1 // pred_region
      _
    $region17: #{wind_input_forward.1} parent=1 // pred_fallthru
      _
    // Predicated region
    $region18: #{wind_input_forward.1} parent=1 // pred_check
      _
    $region19: #{wind_input_forward.1} parent=1 // pred_check_branch
      %1318 = sbr.rel (0) target = $region21
    $region20: #{wind_input_forward.1} parent=1 // pred_region
      _
    $region21: #{wind_input_forward.1} parent=1 // pred_fallthru
      _
    %1319 = vsyncpa [#allocation3], 1

</llo_original>
